<compile_context>
chip_gen: v7x
topology: tpu7x:2x2x1
jax: 0.10.0
libtpu: 0.0.40
codegen_flags: <defaults>
</compile_context>

<pallas_src>
import functools
import math

import jax
import jax.numpy as jnp
from jax.experimental import pallas as pl
from jax.experimental.pallas import tpu as pltpu


def _bn1d_kernel(x_ref, gamma_ref, beta_ref, o_ref, *, eps, n_true):
    # x_ref: (TP, N) block; gamma_ref / beta_ref: (TP, 1); o_ref: (TP, N).
    x = x_ref[...].astype(jnp.float32)
    inv_n = 1.0 / n_true
    # Two-pass stats in f32 (avoid E[x^2]-mean^2 cancellation).
    mean = jnp.sum(x, axis=-1, keepdims=True) * inv_n
    xc = x - mean
    var = jnp.sum(xc * xc, axis=-1, keepdims=True) * inv_n
    # Fold gamma into the per-row scale -> single FMA per element on the VPU.
    scale = gamma_ref[...].astype(jnp.float32) * jax.lax.rsqrt(var + eps)
    y = xc * scale + beta_ref[...].astype(jnp.float32)
    o_ref[...] = y.astype(o_ref.dtype)


def _round_up(v, m):
    return ((v + m - 1) // m) * m


def _vmem_limit_and_budget():
    """Generation-aware VMEM limit (bytes) and a tile-sizing budget."""
    try:
        cap = int(getattr(pltpu.get_tpu_info(), "vmem_capacity_bytes"))
    except Exception:
        cap = 64 * 1024 * 1024  # conservative: v7x physical VMEM per TensorCore
    vmem_limit = min(int(cap * 0.9), 100 * 1024 * 1024)
    budget = int(vmem_limit * 0.7)  # headroom for compiler-internal scratch
    return vmem_limit, budget


def _auto_tile_p(p, n, in_dtype, out_dtype, budget_bytes):
    """Largest P tile (multiple of 8) fitting the VMEM budget, >= 2 grid steps."""
    if p <= 8:
        return p  # block equals full array dim -> always legal
    in_isz = jnp.dtype(in_dtype).itemsize
    out_isz = jnp.dtype(out_dtype).itemsize
    # Live VMEM per block element: double-buffered input + output plus ~2 f32
    # temporaries the compiler may materialize for the reduction.
    per_elem = 2 * in_isz + 2 * out_isz + 2 * 4
    max_elems = max(budget_bytes // per_elem, 8 * max(n, 1))
    # Diminishing returns past ~8 MiB blocks (512-row f32 tiles already ~85% of
    # HBM roofline); also keeps vreg/scratch pressure bounded.
    max_elems = min(max_elems, 2 * 1024 * 1024)
    tp = max(8, (max_elems // max(n, 1)) // 8 * 8)
    # Keep at least 2 grid steps so dimension_semantics=("parallel",) can shard
    # the P axis across both v7x TensorCores.
    two_step_cap = max(8, _round_up(pl.cdiv(p, 2), 8))
    tp = min(tp, two_step_cap, (p // 8) * 8)
    return int(max(tp, 8))


def batchnorm1d_openset(x, gamma, beta, *, eps=1e-5, tile_p=None):
    """Forward pass of the OpenGait BatchNorm1d wrapper (training-mode stats).

    x:      [p, *rest]
    gamma:  [p]   (bn.weight)
    beta:   [p]   (bn.bias)
    """
    # TODO(synk): running_mean / running_var buffer updates (eval-mode stats)
    # are not implemented; only training-mode batch statistics are computed.
    p, *rest = x.shape
    n = int(math.prod(rest)) if rest else 1
    x2d = x.reshape(p, n)

    gamma2d = gamma.reshape(p, 1).astype(jnp.float32)
    beta2d = beta.reshape(p, 1).astype(jnp.float32)

    vmem_limit, budget = _vmem_limit_and_budget()
    tp = _auto_tile_p(p, n, x.dtype, x.dtype, budget) if tile_p is None else int(tile_p)
    grid = pl.cdiv(p, tp)
    # TODO(synk): for very large N (a single tp=8 block exceeds the VMEM
    # budget), switch to a two-phase N-chunked pipeline (accumulate sum/sumsq,
    # then re-stream x to normalize).

    kernel = functools.partial(_bn1d_kernel, eps=float(eps), n_true=float(n))

    isz = jnp.dtype(x.dtype).itemsize
    cost = pl.CostEstimate(
        flops=5 * p * n,
        transcendentals=p,
        bytes_accessed=2 * p * n * isz + 2 * p * 4,
    )

    out2d = pl.pallas_call(
        kernel,
        out_shape=jax.ShapeDtypeStruct((p, n), x.dtype),
        grid_spec=pltpu.PrefetchScalarGridSpec(
            num_scalar_prefetch=0,
            grid=(grid,),
            in_specs=[
                pl.BlockSpec((tp, n), lambda i: (i, 0)),
                pl.BlockSpec((tp, 1), lambda i: (i, 0)),
                pl.BlockSpec((tp, 1), lambda i: (i, 0)),
            ],
            out_specs=pl.BlockSpec((tp, n), lambda i: (i, 0)),
        ),
        compiler_params=pltpu.CompilerParams(
            dimension_semantics=("parallel",),
            vmem_limit_bytes=vmem_limit,
        ),
        cost_estimate=cost,
    )(x2d, gamma2d, beta2d)

    return out2d.reshape(p, *rest)


def _reference(x, gamma, beta, eps=1e-5):
    p = x.shape[0]
    x2d = x.reshape(p, -1).astype(jnp.float32)
    mean = jnp.mean(x2d, axis=1, keepdims=True)
    var = jnp.mean((x2d - mean) ** 2, axis=1, keepdims=True)
    y = (x2d - mean) / jnp.sqrt(var + eps)
    y = y * gamma.reshape(p, 1) + beta.reshape(p, 1)
    return y.reshape(x.shape).astype(x.dtype)


if __name__ == "__main__":
    key = jax.random.PRNGKey(0)
    kx, kg, kb = jax.random.split(key, 3)

    # x: [p, ...]  -> p features; flattened rest dims are BN's batch axis.
    p, c, s = 16, 8, 32          # rest = (8, 32) -> N = 256 (lane-dense)
    x = jax.random.normal(kx, (p, c, s), dtype=jnp.float32)
    gamma = 1.0 + 0.1 * jax.random.normal(kg, (p,), dtype=jnp.float32)
    beta = 0.1 * jax.random.normal(kb, (p,), dtype=jnp.float32)

    out = batchnorm1d_openset(x, gamma, beta)
    out = jax.block_until_ready(out)

    ref = _reference(x, gamma, beta)
    assert out.shape == x.shape
    assert jnp.allclose(out, ref, atol=1e-5, rtol=1e-5), float(
        jnp.max(jnp.abs(out - ref))
    )

    print("KERNEL_OK")
</pallas_src>

<mosaic_0001>
module attributes {stable_mosaic.version = 11 : i64} {
  func.func @_bn1d_kernel(%arg0: i32, %arg1: memref<8x256xf32, #tpu.memory_space<vmem>>, %arg2: memref<8x1xf32, #tpu.memory_space<vmem>>, %arg3: memref<8x1xf32, #tpu.memory_space<vmem>>, %arg4: memref<8x256xf32, #tpu.memory_space<vmem>>) attributes {dimension_semantics = [#tpu.dimension_semantics<parallel>], iteration_bounds = array<i64: 2>, scalar_prefetch = 0 : i64, scratch_operands = 0 : i64, tpu.core_type = #tpu.core_type<tc>, window_params = [{transform_indices = @transform_0, window_bounds = array<i64: 8, 256>}, {transform_indices = @transform_1, window_bounds = array<i64: 8, 1>}, {transform_indices = @transform_2, window_bounds = array<i64: 8, 1>}, {transform_indices = @transform_3, window_bounds = array<i64: 8, 256>}]} {
    %c0 = arith.constant 0 : index
    %c0_0 = arith.constant 0 : index
    %0 = vector.load %arg1[%c0, %c0_0] : memref<8x256xf32, #tpu.memory_space<vmem>>, vector<8x256xf32>
    %cst = arith.constant dense<0.000000e+00> : vector<8xf32>
    %1 = vector.multi_reduction <add>, %0, %cst [1] : vector<8x256xf32> to vector<8xf32>
    %2 = vector.shape_cast %1 : vector<8xf32> to vector<8x1xf32>
    %cst_1 = arith.constant 3.906250e-03 : f32
    %3 = vector.broadcast %cst_1 : f32 to vector<8x1xf32>
    %4 = arith.mulf %2, %3 : vector<8x1xf32>
    %5 = vector.broadcast %4 : vector<8x1xf32> to vector<8x256xf32>
    %6 = arith.subf %0, %5 : vector<8x256xf32>
    %7 = arith.mulf %6, %6 : vector<8x256xf32>
    %cst_2 = arith.constant dense<0.000000e+00> : vector<8xf32>
    %8 = vector.multi_reduction <add>, %7, %cst_2 [1] : vector<8x256xf32> to vector<8xf32>
    %9 = vector.shape_cast %8 : vector<8xf32> to vector<8x1xf32>
    %cst_3 = arith.constant 3.906250e-03 : f32
    %10 = vector.broadcast %cst_3 : f32 to vector<8x1xf32>
    %11 = arith.mulf %9, %10 : vector<8x1xf32>
    %c0_4 = arith.constant 0 : index
    %c0_5 = arith.constant 0 : index
    %12 = vector.load %arg2[%c0_4, %c0_5] : memref<8x1xf32, #tpu.memory_space<vmem>>, vector<8x1xf32>
    %cst_6 = arith.constant 9.99999974E-6 : f32
    %13 = vector.broadcast %cst_6 : f32 to vector<8x1xf32>
    %14 = arith.addf %11, %13 : vector<8x1xf32>
    %15 = math.rsqrt %14 : vector<8x1xf32>
    %16 = arith.mulf %12, %15 : vector<8x1xf32>
    %17 = vector.broadcast %16 : vector<8x1xf32> to vector<8x256xf32>
    %18 = arith.mulf %6, %17 : vector<8x256xf32>
    %c0_7 = arith.constant 0 : index
    %c0_8 = arith.constant 0 : index
    %19 = vector.load %arg3[%c0_7, %c0_8] : memref<8x1xf32, #tpu.memory_space<vmem>>, vector<8x1xf32>
    %20 = vector.broadcast %19 : vector<8x1xf32> to vector<8x256xf32>
    %21 = arith.addf %18, %20 : vector<8x256xf32>
    %c0_9 = arith.constant 0 : index
    %c0_10 = arith.constant 0 : index
    %22 = vector.load %arg4[%c0_9, %c0_10] : memref<8x256xf32, #tpu.memory_space<vmem>>, vector<8x256xf32>
    tpu.vector_store %arg4[%c0_9, %c0_10], %21 {strides = array<i32>} : memref<8x256xf32, #tpu.memory_space<vmem>>, vector<8x256xf32>,
    return
  }
  func.func @transform_0(%arg0: i32) -> (i32, i32) {
    %c0_i32 = arith.constant 0 : i32
    %c0_i32_0 = arith.constant 0 : i32
    return %arg0, %c0_i32 : i32, i32
  }
  func.func @transform_1(%arg0: i32) -> (i32, i32) {
    %c0_i32 = arith.constant 0 : i32
    %c0_i32_0 = arith.constant 0 : i32
    return %arg0, %c0_i32 : i32, i32
  }
  func.func @transform_2(%arg0: i32) -> (i32, i32) {
    %c0_i32 = arith.constant 0 : i32
    %c0_i32_0 = arith.constant 0 : i32
    return %arg0, %c0_i32 : i32, i32
  }
  func.func @transform_3(%arg0: i32) -> (i32, i32) {
    %c0_i32 = arith.constant 0 : i32
    %c0_i32_0 = arith.constant 0 : i32
    return %arg0, %c0_i32 : i32, i32
  }
}

</mosaic_0001>

<llo_original>
// kernel: tpu_custom_call.1
$region0: #{tpu_custom_call.1}
  #allocation0 [shape = 'u32[]', space=smem, size = 0x4, offset = 0x4, fixed_abs, tag = 'smem constant byte address 0x4 - core index']
  #allocation1 [shape = 'u32[144,128]{1,0:T(1,128)}', space=vmem, size = 0x12000, scoped, tag = 'internal scratch']
  %s0 = inlined_call_operand.vmem [shape: f32[16,256], index: 0, kind: input, shape index: {}]
  %s1 = inlined_call_operand.vmem [shape: f32[16,1], index: 1, kind: input, shape index: {}]
  %s2 = inlined_call_operand.vmem [shape: f32[16,1], index: 2, kind: input, shape index: {}]
  %s3 = inlined_call_operand.hbm [shape: f32[16,256], index: 3, kind: output, shape index: {}]
  %s4 = sld [smem:[#allocation0]]
  $region45: #{tpu_custom_call.1} parent=0
    _
  %s6 = ssub.s32 1, %s4
  %s7 = scalar_select 0, %s6, %s4
  $region1: #{tpu_custom_call.1} parent=0
    #allocation2 [shape = 'u8[16384]{0}', space=vmem, size = 0x4000, scoped, tag = 'output window, operand 0']
    #allocation3 [shape = 's32[2]{0}', space=sflag, size = 0x8, scoped, tag = 'scoped memory for tpu_custom_call.1']
    %8 = vsyncpa [#allocation3], 0
    %s9 = scalar_lea.sflag [#allocation3], 1
    %10 = vsyncpa %s9, 0
    loop: start=0, step=1, limit=4
    $region2: #{tpu_custom_call.1} parent=1 // loop_pre_header
      _
    $region3: #{tpu_custom_call.1} parent=1 // loop_header
      %s12 = sphi 0, %s16
      %p13 = scmp.ge.s32.totalorder %s12, 4
      %s22 = sphi 0, %s24
      %s25 = sphi 0, %s22
      %s26 = sphi 0, %s25
      %s42 = sphi 0, %s26
      %s48 = sphi 0, %s50
      %s51 = sphi 0, %s48
      %s52 = sphi 0, %s51
      %s68 = sphi 0, %s52
      %s74 = sphi 0, %s76
      %s77 = sphi 0, %s74
      %s78 = sphi 0, %s77
      %s94 = sphi 0, %s78
      %s100 = sphi 0, %s102
      %s103 = sphi 0, %s100
      %s104 = sphi 0, %s103
      %s120 = sphi 0, %s104
    $region4: #{tpu_custom_call.1} parent=1 // loop_header_branch
      %15 = sbr.rel (%p13) target = $region8
    $region5: #{tpu_custom_call.1} parent=1 // loop_body
      %s17 = ssub.s32 %s12, 1
      %s18 = ssub.s32 %s12, 2
      %s19 = sadd.s32 %s12, 1
      %s20 = ssub.s32 %s12, %s19
      %p21 = scmp.eq.s32.totalorder %s20, 0
      %s23 = sadd.s32 %s22, 1
      %s24 = scalar_select %p21, %s22, %s23
      %p27 = pneg %p21
      %p28 = scmp.eq.s32.totalorder %s12, 1
      %p29 = por %p27, %p28
      %p30 = scmp.ne.s32.totalorder %s22, %s25
      %p31 = scmp.eq.s32.totalorder %s12, 0
      %p32 = por %p30, %p31
      %p33 = scmp.ne.s32.totalorder %s22, %s25
      %p34 = scmp.eq.s32.totalorder %s17, 1
      %p35 = por %p33, %p34
      %p36 = scmp.ne.s32.totalorder %s25, %s26
      %p37 = scmp.eq.s32.totalorder %s17, 0
      %p38 = por %p36, %p37
      %p39 = scmp.ne.s32.totalorder %s25, %s26
      %p40 = scmp.eq.s32.totalorder %s18, 1
      %p41 = por %p39, %p40
      %p43 = scmp.ne.s32.totalorder %s26, %s42
      %p44 = scmp.eq.s32.totalorder %s18, 0
      %p45 = por %p43, %p44
      %s46 = ssub.s32 %s12, %s19
      %p47 = scmp.eq.s32.totalorder %s46, 0
      %s49 = sadd.s32 %s48, 1
      %s50 = scalar_select %p47, %s48, %s49
      %p53 = pneg %p47
      %p54 = scmp.eq.s32.totalorder %s12, 1
      %p55 = por %p53, %p54
      %p56 = scmp.ne.s32.totalorder %s48, %s51
      %p57 = scmp.eq.s32.totalorder %s12, 0
      %p58 = por %p56, %p57
      %p59 = scmp.ne.s32.totalorder %s48, %s51
      %p60 = scmp.eq.s32.totalorder %s17, 1
      %p61 = por %p59, %p60
      %p62 = scmp.ne.s32.totalorder %s51, %s52
      %p63 = scmp.eq.s32.totalorder %s17, 0
      %p64 = por %p62, %p63
      %p65 = scmp.ne.s32.totalorder %s51, %s52
      %p66 = scmp.eq.s32.totalorder %s18, 1
      %p67 = por %p65, %p66
      %p69 = scmp.ne.s32.totalorder %s52, %s68
      %p70 = scmp.eq.s32.totalorder %s18, 0
      %p71 = por %p69, %p70
      %s72 = ssub.s32 %s12, %s19
      %p73 = scmp.eq.s32.totalorder %s72, 0
      %s75 = sadd.s32 %s74, 1
      %s76 = scalar_select %p73, %s74, %s75
      %p79 = pneg %p73
      %p80 = scmp.eq.s32.totalorder %s12, 1
      %p81 = por %p79, %p80
      %p82 = scmp.ne.s32.totalorder %s74, %s77
      %p83 = scmp.eq.s32.totalorder %s12, 0
      %p84 = por %p82, %p83
      %p85 = scmp.ne.s32.totalorder %s74, %s77
      %p86 = scmp.eq.s32.totalorder %s17, 1
      %p87 = por %p85, %p86
      %p88 = scmp.ne.s32.totalorder %s77, %s78
      %p89 = scmp.eq.s32.totalorder %s17, 0
      %p90 = por %p88, %p89
      %p91 = scmp.ne.s32.totalorder %s77, %s78
      %p92 = scmp.eq.s32.totalorder %s18, 1
      %p93 = por %p91, %p92
      %p95 = scmp.ne.s32.totalorder %s78, %s94
      %p96 = scmp.eq.s32.totalorder %s18, 0
      %p97 = por %p95, %p96
      %s98 = ssub.s32 %s12, %s19
      %p99 = scmp.eq.s32.totalorder %s98, 0
      %s101 = sadd.s32 %s100, 1
      %s102 = scalar_select %p99, %s100, %s101
      %p105 = pneg %p99
      %p106 = scmp.eq.s32.totalorder %s12, 1
      %p107 = por %p105, %p106
      %p108 = scmp.ne.s32.totalorder %s100, %s103
      %p109 = scmp.eq.s32.totalorder %s12, 0
      %p110 = por %p108, %p109
      %p111 = scmp.ne.s32.totalorder %s100, %s103
      %p112 = scmp.eq.s32.totalorder %s17, 1
      %p113 = por %p111, %p112
      %p114 = scmp.ne.s32.totalorder %s103, %s104
      %p115 = scmp.eq.s32.totalorder %s17, 0
      %p116 = por %p114, %p115
      %p117 = scmp.ne.s32.totalorder %s103, %s104
      %p118 = scmp.eq.s32.totalorder %s18, 1
      %p119 = por %p117, %p118
      %p121 = scmp.ne.s32.totalorder %s104, %s120
      %p122 = scmp.eq.s32.totalorder %s18, 0
      %p123 = por %p121, %p122
      %p124 = scmp.le.s32.totalorder 1, %s12
      %p125 = scmp.lt.s32.totalorder %s12, 3
      %p126 = pnand %p124, %p125
      %p127 = pneg %p126
      // Predicated region
      $region9: #{tpu_custom_call.1} parent=5 // pred_check
        _
      $region10: #{tpu_custom_call.1} parent=5 // pred_check_branch
        %129 = sbr.rel (%p126) target = $region12
      $region11: #{tpu_custom_call.1} parent=5 // pred_region
        %s130 = ssub.s32 %s12, 1
      $region12: #{tpu_custom_call.1} parent=5 // pred_fallthru
        _
      %p131 = scmp.lt.s32.totalorder %s12, 2
      // Predicated region
      $region13: #{tpu_custom_call.1} parent=5 // pred_check
        %p132 = pneg %p131
      $region14: #{tpu_custom_call.1} parent=5 // pred_check_branch
        %134 = sbr.rel (%p132) target = $region16
      $region15: #{tpu_custom_call.1} parent=5 // pred_region
        // Predicated region
        $region17: #{tpu_custom_call.1} parent=15 // pred_check
          %p135 = pneg %p32
        $region18: #{tpu_custom_call.1} parent=15 // pred_check_branch
          %137 = sbr.rel (%p135) target = $region20
        $region19: #{tpu_custom_call.1} parent=15 // pred_region
          %p138 = scmp.lt.s32.totalorder %s12, 1
          %s139 = scalar_select %p138, %s12, 1
          %s140 = smul.addr %s139, 2
          %s141 = smul.addr %s140, 8
          %s142 = scalar_lea.vmem %s0, %s141
        $region20: #{tpu_custom_call.1} parent=15 // pred_fallthru
          _
        // Predicated region
        $region21: #{tpu_custom_call.1} parent=15 // pred_check
          %p143 = pneg %p58
        $region22: #{tpu_custom_call.1} parent=15 // pred_check_branch
          %145 = sbr.rel (%p143) target = $region24
        $region23: #{tpu_custom_call.1} parent=15 // pred_region
          %p146 = scmp.lt.s32.totalorder %s12, 1
          %s147 = scalar_select %p146, %s12, 1
          %s148 = smul.addr %s147, 8
          %s149 = scalar_lea.vmem %s1, %s148
        $region24: #{tpu_custom_call.1} parent=15 // pred_fallthru
          _
        // Predicated region
        $region25: #{tpu_custom_call.1} parent=15 // pred_check
          %p150 = pneg %p84
        $region26: #{tpu_custom_call.1} parent=15 // pred_check_branch
          %152 = sbr.rel (%p150) target = $region28
        $region27: #{tpu_custom_call.1} parent=15 // pred_region
          %p153 = scmp.lt.s32.totalorder %s12, 1
          %s154 = scalar_select %p153, %s12, 1
          %s155 = smul.addr %s154, 8
          %s156 = scalar_lea.vmem %s2, %s155
        $region28: #{tpu_custom_call.1} parent=15 // pred_fallthru
          _
      $region16: #{tpu_custom_call.1} parent=5 // pred_fallthru
        _
      %p157 = scmp.le.s32.totalorder 1, %s12
      %p158 = scmp.lt.s32.totalorder %s12, 3
      %p159 = pnand %p157, %p158
      %p160 = pneg %p159
      // Predicated region
      $region29: #{tpu_custom_call.1} parent=5 // pred_check
        _
      $region30: #{tpu_custom_call.1} parent=5 // pred_check_branch
        %162 = sbr.rel (%p159) target = $region32
      $region31: #{tpu_custom_call.1} parent=5 // pred_region
        %s163 = ssub.s32 %s12, 1
        %p164 = scmp.lt.s32.totalorder %s17, 1
        %s165 = scalar_select %p164, %s17, 1
        %s166 = smul.addr %s165, 2
        %s167 = smul.addr %s166, 8
        %s168 = scalar_lea.vmem %s0, %s167
        %p169 = pneg %p38
        %p170 = pneg %p35
        %p171 = scmp.lt.s32.totalorder %s17, 1
        %s172 = scalar_select %p171, %s17, 1
        %s173 = smul.addr %s172, 8
        %s174 = scalar_lea.vmem %s1, %s173
        %p175 = pneg %p64
        %p176 = pneg %p61
        %p177 = scmp.lt.s32.totalorder %s17, 1
        %s178 = scalar_select %p177, %s17, 1
        %s179 = smul.addr %s178, 8
        %s180 = scalar_lea.vmem %s2, %s179
        %p181 = pneg %p90
        %p182 = pneg %p87
        %p183 = pneg %p116
        %p184 = pneg %p113
        %s185 = sand.u32 %s103, 1
        %s186 = scalar_lea.sflag [#allocation3], %s185
        %s187 = sand.u32 %s103, 1
        %s188 = smul.addr %s187, 16
        %s189 = scalar_lea.vmem [#allocation2], %s188
        %p190 = scmp.lt.s32.totalorder %s17, 1
        %s191 = scalar_select %p190, %s17, 1
        %s192 = smul.addr %s191, 2
        %s193 = smul.addr %s192, 8
        %s194 = scalar_lea.vmem %s0, %s193
        %p195 = scmp.lt.s32.totalorder %s17, 1
        %s196 = scalar_select %p195, %s17, 1
        %s197 = smul.addr %s196, 8
        %s198 = scalar_lea.vmem %s1, %s197
        %p199 = scmp.lt.s32.totalorder %s17, 1
        %s200 = scalar_select %p199, %s17, 1
        %s201 = smul.addr %s200, 8
        %s202 = scalar_lea.vmem %s2, %s201
        %v203 = vld [vmem:[%s194] sm:$0xff]
        %v204 = vld [vmem:[%s194 + $0x8] sm:$0xff]
        %v205 = vadd.f32 %v203, %v204
        %206 = vadd.xlane.f32.xlu0 %v205
        %v207 = vpop.xlane.xlu0 %206
        %v208 = vmul.f32 %v207, 0.00390625
        %v209 = vsub.f32 %v203, %v208
        %v210 = vsub.f32 %v204, %v208
        %v211 = vmul.f32 %v209, %v209
        %v212 = vmul.f32 %v210, %v210
        %v213 = vadd.f32 %v211, %v212
        %214 = vadd.xlane.f32.xlu0 %v213
        %v215 = vpop.xlane.xlu0 %214
        %v216 = vmul.f32 %v215, 0.00390625
        %v217 = vld [vmem:[%s198] sm:$0xff]
        %v218 = vadd.f32 %v216, 1e-05
        %v219 = vrsqrt.pop %v218
        %v220 = vmul.f32 %v217, %v219
        %222 = vset.pattern.permute.xlu0 0
        %223 = vperm.xlu0 %222, %v220
        %v224 = vpop.permute.xlu0 %223
        %v226 = vmul.f32 %v209, %v224
        %v227 = vmul.f32 %v210, %v224
        %v228 = vld [vmem:[%s202] sm:$0xff]
        %230 = vset.pattern.permute.xlu0 0
        %231 = vperm.xlu0 %230, %v228
        %v232 = vpop.permute.xlu0 %231
        %v234 = vadd.f32 %v226, %v232
        %v235 = vadd.f32 %v227, %v232
        %236 = vst [vmem:[%s189] sm:$0xff] %v234
        %237 = vst [vmem:[%s189 + $0x8] sm:$0xff] %v235
        %s238 = sand.u32 %s103, 1
        %s239 = scalar_lea.sflag [#allocation3], %s238
        %s240 = sand.u32 %s103, 1
        %s241 = smul.addr %s240, 16
        %s242 = scalar_lea.vmem [#allocation2], %s241
        // Predicated region
        $region33: #{tpu_custom_call.1} parent=31 // pred_check
          %p243 = pneg %p113
        $region34: #{tpu_custom_call.1} parent=31 // pred_check_branch
          %245 = sbr.rel (%p243) target = $region36
        $region35: #{tpu_custom_call.1} parent=31 // pred_region
          %s247 = ssub.s32 256, 256
          %248 = vsyncadd %s239, %s247
          %s249 = smul.addr %s17, 2
          %s250 = smul.addr %s249, 128
          %s251 = scalar_lea.hbm %s3, %s250
          %s253 = sshll.u32 %s242, 4
          %s254 = int_to_ptr.vmem [resolvable:$true] %s253
          %256 = dma.vmem_to_hbm [thread:$0]  %s254, 256, %s251, %s239
        $region36: #{tpu_custom_call.1} parent=31 // pred_fallthru
          _
      $region32: #{tpu_custom_call.1} parent=5 // pred_fallthru
        _
      %p257 = scmp.le.s32.totalorder 2, %s12
      // Predicated region
      $region37: #{tpu_custom_call.1} parent=5 // pred_check
        %p258 = pneg %p257
      $region38: #{tpu_custom_call.1} parent=5 // pred_check_branch
        %260 = sbr.rel (%p258) target = $region40
      $region39: #{tpu_custom_call.1} parent=5 // pred_region
        %s261 = ssub.s32 %s12, 2
        // Predicated region
        $region41: #{tpu_custom_call.1} parent=39 // pred_check
          %p262 = pneg %p119
        $region42: #{tpu_custom_call.1} parent=39 // pred_check_branch
          %264 = sbr.rel (%p262) target = $region44
        $region43: #{tpu_custom_call.1} parent=39 // pred_region
          %s265 = sand.u32 %s104, 1
          %s266 = scalar_lea.sflag [#allocation3], %s265
          %s267 = sand.u32 %s104, 1
          %s268 = smul.addr %s267, 16
          %s269 = scalar_lea.vmem [#allocation2], %s268
          %270 = dma.done %s266, 256
        $region44: #{tpu_custom_call.1} parent=39 // pred_fallthru
          _
      $region40: #{tpu_custom_call.1} parent=5 // pred_fallthru
        _
    $region6: #{tpu_custom_call.1} parent=1 // loop_footer
      %s16 = sadd.s32 1, %s12
    $region7: #{tpu_custom_call.1} parent=1 // loop_footer_branch
      %11 = sbr.rel target = $region3
    $region8: #{tpu_custom_call.1} parent=1 // loop_exit
      _
    %271 = vsyncpa [#allocation3], 1
    %s272 = scalar_lea.sflag [#allocation3], 1
    %273 = vsyncpa %s272, 1

</llo_original>
